<compile_context>
chip_gen: v5e
topology: v5e:2x2
jax: 0.10.0
libtpu: 0.0.40
codegen_flags: <defaults>
</compile_context>

<pallas_src>
import functools
import math

import jax
import jax.numpy as jnp
from jax.experimental import pallas as pl
from jax.experimental.pallas import tpu as pltpu

LANE = 128


def _crps_partial_kernel(x_ref, y_ref, out_ref, *, coef, tb, sr, n_slabs,
                         rows_per_block, rows_total, jpc, need_mask):
    """Accumulate partial CRPS sums for one (batch-block, core) output slab.

    x_ref:   (tb, 2, rows_per_block, W)  both ensemble members, native dtype.
    y_ref:   (tb, rows_per_block, W)     target, native dtype.
    out_ref: (sr, W) f32                 resident across the j (reduction) axis.
    """
    c = pl.program_id(1)
    j = pl.program_id(2)

    @pl.when(j == 0)
    def _init():
        out_ref[...] = jnp.zeros_like(out_ref)

    # First logical row covered by this block (un-clamped: phantom blocks of
    # the core-split axis land past rows_total and mask to exactly zero).
    row0 = (c * jpc + j) * rows_per_block
    w = out_ref.shape[-1]

    def accumulate(masked):
        def body(t, acc):
            if tb == 1 and n_slabs == 1:
                b, i = 0, 0
            elif tb == 1:
                b, i = 0, t
            elif n_slabs == 1:
                b, i = t, 0
            else:
                b = t // n_slabs
                i = t - b * n_slabs
            base = i * sr
            if not isinstance(base, int):
                base = pl.multiple_of(base, sr)
            x0 = x_ref[b, 0, pl.ds(base, sr), :].astype(jnp.float32)
            x1 = x_ref[b, 1, pl.ds(base, sr), :].astype(jnp.float32)
            yv = y_ref[b, pl.ds(base, sr), :].astype(jnp.float32)
            crps = (0.5 * (jnp.abs(x0 - yv) + jnp.abs(x1 - yv))
                    - coef * jnp.abs(x0 - x1))
            if masked:
                # Rows at/after `valid` are outside the logical array; the
                # boundary-block DMA leaves unspecified data there: discard.
                valid = (rows_total - row0) - base
                rid = jax.lax.broadcasted_iota(jnp.int32, (sr, 1), 0)
                crps = jnp.where(rid < valid, crps, 0.0)
            return acc + crps

        acc = jax.lax.fori_loop(0, tb * n_slabs, body,
                                jnp.zeros((sr, w), jnp.float32))
        out_ref[...] += acc

    if need_mask:
        fully_valid = row0 + rows_per_block <= rows_total

        @pl.when(fully_valid)
        def _unmasked():
            accumulate(masked=False)

        @pl.when(jnp.logical_not(fully_valid))
        def _masked():
            accumulate(masked=True)
    else:
        accumulate(masked=False)


def crps_loss(x: jax.Array, y: jax.Array, alpha: float, *,
              target_block_bytes: int = 8 * 1024 * 1024) -> jax.Array:
    """Almost-fair CRPS loss (scalar), matching CRPSLoss(alpha).forward(x, y).

    target_block_bytes tunes the per-grid-step input DMA size:
      ~4-6 MiB is plenty on v5e, ~6-8 MiB on v6e, ~8-12 MiB on v7x.
    """
    assert x.ndim == y.ndim + 1 and x.shape[1] == 2, "expects a 2-member ensemble at axis 1"
    assert x.shape[:1] + x.shape[2:] == y.shape
    target_block_bytes = min(int(target_block_bytes), 12 << 20)

    batch = y.shape[0]
    rest = y.shape[1:]
    m = math.prod(rest)                 # elements per batch item (per member)
    n = batch * m                       # total elements averaged over

    # ---- (rows, lanes) factorization using only free (contiguous) reshapes.
    if m % LANE == 0:
        w = LANE                        # fully lane-dense fast path
    else:
        # Use native trailing spatial dims as the lane axis (e.g. W=1440 for
        # lat/lon grids); merge trailing dims until reasonably wide.
        w = 1
        k = len(rest)
        while k > 0 and w < LANE:
            w *= int(rest[k - 1])
            k -= 1
    r = m // w                          # exact: r * w == m, no padding anywhere
    x4 = x.reshape(batch, 2, r, w)
    y3 = y.reshape(batch, r, w)

    x_item = jnp.dtype(x.dtype).itemsize
    y_item = jnp.dtype(y.dtype).itemsize
    bytes_per_row = w * (2 * x_item + y_item)

    # ---- accumulator slab height (small enough that loop temps stay in vregs).
    if w <= 128:
        sr = 32
    elif w <= 256:
        sr = 16
    else:
        sr = 8

    # ---- fold several batch items per block when each item is small.
    per_batch_bytes = r * bytes_per_row
    max_fold = max(1, target_block_bytes // max(per_batch_bytes, 1))
    tb = 1
    for d in range(1, batch + 1):
        if batch % d == 0 and d <= max_fold:
            tb = d
    nb = batch // tb

    # ---- rows per grid step (multiple of sr, or the full row extent).
    if r <= sr:
        sr = r
        tr = r
    else:
        rows_budget = max(sr, target_block_bytes // max(tb * bytes_per_row, 1))
        if rows_budget >= r and r % sr == 0:
            tr = r
        else:
            tr = max(sr, min((rows_budget // sr) * sr, (r // sr) * sr))
    n_slabs = tr // sr

    num_j = -(-r // tr)                 # row blocks per (batch-block, core)
    nc = 2 if num_j >= 4 else 1         # v7x: let both TensorCores stream
    jpc = -(-num_j // nc)
    has_phantom = nc * jpc != num_j     # core split may create empty tail blocks
    need_mask = (r % tr != 0) or has_phantom

    kernel = functools.partial(
        _crps_partial_kernel,
        coef=(1.0 + float(alpha)) / 4.0,
        tb=tb, sr=sr, n_slabs=n_slabs,
        rows_per_block=tr, rows_total=r, jpc=jpc, need_mask=need_mask)

    last_j = num_j - 1
    if has_phantom:
        # Clamp phantom blocks onto the last real block (in-bounds DMA); the
        # kernel masks their contribution to exactly zero.
        def jj(c, j):
            return jnp.minimum(c * jpc + j, last_j)
    else:
        def jj(c, j):
            return c * jpc + j

    in_specs = [
        pl.BlockSpec((tb, 2, tr, w), lambda b, c, j: (b, 0, jj(c, j), 0)),
        pl.BlockSpec((tb, tr, w), lambda b, c, j: (b, jj(c, j), 0)),
    ]
    out_specs = pl.BlockSpec((None, None, sr, w), lambda b, c, j: (b, c, 0, 0))

    step_in_bytes = tb * tr * w * (2 * x_item + y_item)
    out_bytes = nb * nc * sr * w * 4
    cost = pl.CostEstimate(
        flops=10 * n,
        transcendentals=0,
        bytes_accessed=nb * nc * jpc * step_in_bytes + out_bytes)
    vmem_limit = int(min(64 << 20, max(32 << 20, 2 * step_in_bytes + (4 << 20))))

    partials = pl.pallas_call(
        kernel,
        out_shape=jax.ShapeDtypeStruct((nb, nc, sr, w), jnp.float32),
        grid_spec=pltpu.PrefetchScalarGridSpec(
            num_scalar_prefetch=0,
            grid=(nb, nc, jpc),
            in_specs=in_specs,
            out_specs=out_specs,
        ),
        compiler_params=pltpu.CompilerParams(
            dimension_semantics=("parallel", "parallel", "arbitrary"),
            vmem_limit_bytes=vmem_limit,
        ),
        cost_estimate=cost,
    )(x4, y3)

    # Tiny epilogue: reduce the per-(batch-block, core) partial slabs and mean.
    return jnp.sum(partials) * (1.0 / n)


if __name__ == "__main__":
    key = jax.random.PRNGKey(0)
    kxa, kya, kxb, kyb, kxc, kyc = jax.random.split(key, 6)

    alpha = 0.95  # deterministic CRPSLoss(alpha) constructor parameter

    def reference(x, y):
        skill = 0.5 * (jnp.abs(x[:, 0] - y) + jnp.abs(x[:, 1] - y))
        spread = jnp.abs(x[:, 0] - x[:, 1])
        return jnp.mean(skill - ((1.0 + alpha) / 4.0) * spread)

    # Small shapes consistent with the module: batch=2, ensemble=2, C=16, H=W=16.
    B, S, C, H, W = 2, 2, 16, 16, 16
    xa = jax.random.normal(kxa, (B, S, C, H, W), dtype=jnp.float32)
    ya = jax.random.normal(kya, (B, C, H, W), dtype=jnp.float32)
    loss_a = jax.block_until_ready(crps_loss(xa, ya, alpha))
    ref_a = reference(xa, ya)
    assert jnp.allclose(loss_a, ref_a, atol=1e-5, rtol=1e-5), (loss_a, ref_a)

    # Ragged element count (m % 128 != 0): copy-free native-lane fallback path.
    xb = jax.random.normal(kxb, (2, 2, 3, 21, 18), dtype=jnp.float32)
    yb = jax.random.normal(kyb, (2, 3, 21, 18), dtype=jnp.float32)
    loss_b = jax.block_until_ready(crps_loss(xb, yb, alpha))
    ref_b = reference(xb, yb)
    assert jnp.allclose(loss_b, ref_b, atol=1e-5, rtol=1e-5), (loss_b, ref_b)

    # batch=1 with a tiny block budget: exercises the multi-step resident
    # accumulator, the gated row-tail mask, the core-split axis and phantom
    # block masking.
    xc = jax.random.normal(kxc, (1, 2, 159, 128), dtype=jnp.float32)
    yc = jax.random.normal(kyc, (1, 159, 128), dtype=jnp.float32)
    loss_c = jax.block_until_ready(
        crps_loss(xc, yc, alpha, target_block_bytes=32 * 1024))
    ref_c = reference(xc, yc)
    assert jnp.allclose(loss_c, ref_c, atol=1e-5, rtol=1e-5), (loss_c, ref_c)

    print("KERNEL_OK")
</pallas_src>

<mosaic_0001>
module attributes {stable_mosaic.version = 11 : i64} {
  func.func @_crps_partial_kernel(%arg0: i32, %arg1: i32, %arg2: i32, %arg3: memref<2x2x32x128xf32, #tpu.memory_space<vmem>>, %arg4: memref<2x32x128xf32, #tpu.memory_space<vmem>>, %arg5: memref<1x1x32x128xf32, #tpu.memory_space<vmem>>) attributes {dimension_semantics = [#tpu.dimension_semantics<parallel>, #tpu.dimension_semantics<parallel>, #tpu.dimension_semantics<arbitrary>], iteration_bounds = array<i64: 1, 1, 1>, scalar_prefetch = 0 : i64, scratch_operands = 0 : i64, tpu.core_type = #tpu.core_type<tc>, window_params = [{transform_indices = @transform_0, window_bounds = array<i64: 2, 2, 32, 128>}, {transform_indices = @transform_1, window_bounds = array<i64: 2, 32, 128>}, {transform_indices = @transform_2, window_bounds = array<i64: 1, 1, 32, 128>}]} {
    %c0_i32 = arith.constant 0 : i32
    %0 = arith.cmpi eq, %arg2, %c0_i32 : i32
    %1 = arith.extui %0 : i1 to i32
    %c0_i32_0 = arith.constant 0 : i32
    %2 = arith.cmpi ne, %1, %c0_i32_0 : i32
    scf.if %2 {
      %cst_10 = arith.constant 0.000000e+00 : f32
      %12 = vector.broadcast %cst_10 : f32 to vector<32x128xf32>
      %c0_11 = arith.constant 0 : index
      %c0_12 = arith.constant 0 : index
      %c0_13 = arith.constant 0 : index
      %c0_14 = arith.constant 0 : index
      %13 = vector.load %arg5[%c0_11, %c0_12, %c0_13, %c0_14] : memref<1x1x32x128xf32, #tpu.memory_space<vmem>>, vector<1x1x32x128xf32>
      %14 = vector.shape_cast %13 : vector<1x1x32x128xf32> to vector<32x128xf32>
      %15 = vector.shape_cast %12 : vector<32x128xf32> to vector<1x1x32x128xf32>
      tpu.vector_store %arg5[%c0_11, %c0_12, %c0_13, %c0_14], %15 {strides = array<i32>} : memref<1x1x32x128xf32, #tpu.memory_space<vmem>>, vector<1x1x32x128xf32>,
    } else {
    }
    %cst = arith.constant 0.000000e+00 : f32
    %3 = vector.broadcast %cst : f32 to vector<32x128xf32>
    %c0_i32_1 = arith.constant 0 : i32
    %c2_i32 = arith.constant 2 : i32
    %4 = arith.addi %c0_i32_1, %c2_i32 : i32
    %c1_i32 = arith.constant 1 : i32
    %5 = scf.for %arg6 = %c0_i32_1 to %4 step %c1_i32 iter_args(%arg7 = %3) -> (vector<32x128xf32>)  : i32 {
      %12 = arith.index_cast %arg6 : i32 to index
      %c0_10 = arith.constant 0 : index
      %c0_11 = arith.constant 0 : index
      %c0_12 = arith.constant 0 : index
      %13 = vector.load %arg3[%12, %c0_10, %c0_11, %c0_12] : memref<2x2x32x128xf32, #tpu.memory_space<vmem>>, vector<1x1x32x128xf32>
      %14 = vector.shape_cast %13 : vector<1x1x32x128xf32> to vector<32x128xf32>
      %15 = arith.index_cast %arg6 : i32 to index
      %c1 = arith.constant 1 : index
      %c0_13 = arith.constant 0 : index
      %c0_14 = arith.constant 0 : index
      %16 = vector.load %arg3[%15, %c1, %c0_13, %c0_14] : memref<2x2x32x128xf32, #tpu.memory_space<vmem>>, vector<1x1x32x128xf32>
      %17 = vector.shape_cast %16 : vector<1x1x32x128xf32> to vector<32x128xf32>
      %18 = arith.index_cast %arg6 : i32 to index
      %c0_15 = arith.constant 0 : index
      %c0_16 = arith.constant 0 : index
      %19 = vector.load %arg4[%18, %c0_15, %c0_16] : memref<2x32x128xf32, #tpu.memory_space<vmem>>, vector<1x32x128xf32>
      %20 = vector.shape_cast %19 : vector<1x32x128xf32> to vector<32x128xf32>
      %21 = arith.subf %14, %20 : vector<32x128xf32>
      %22 = math.absf %21 : vector<32x128xf32>
      %23 = arith.subf %17, %20 : vector<32x128xf32>
      %24 = math.absf %23 : vector<32x128xf32>
      %25 = arith.addf %22, %24 : vector<32x128xf32>
      %cst_17 = arith.constant 5.000000e-01 : f32
      %26 = vector.broadcast %cst_17 : f32 to vector<32x128xf32>
      %27 = arith.mulf %26, %25 : vector<32x128xf32>
      %28 = arith.subf %14, %17 : vector<32x128xf32>
      %29 = math.absf %28 : vector<32x128xf32>
      %cst_18 = arith.constant 4.875000e-01 : f32
      %30 = vector.broadcast %cst_18 : f32 to vector<32x128xf32>
      %31 = arith.mulf %30, %29 : vector<32x128xf32>
      %32 = arith.subf %27, %31 : vector<32x128xf32>
      %33 = arith.addf %arg7, %32 : vector<32x128xf32>
      scf.yield %33 : vector<32x128xf32>
    }
    %c2_i32_2 = arith.constant 2 : i32
    %c0 = arith.constant 0 : index
    %c0_3 = arith.constant 0 : index
    %c0_4 = arith.constant 0 : index
    %c0_5 = arith.constant 0 : index
    %6 = vector.load %arg5[%c0, %c0_3, %c0_4, %c0_5] : memref<1x1x32x128xf32, #tpu.memory_space<vmem>>, vector<1x1x32x128xf32>
    %7 = vector.shape_cast %6 : vector<1x1x32x128xf32> to vector<32x128xf32>
    %8 = arith.addf %7, %5 : vector<32x128xf32>
    %c0_6 = arith.constant 0 : index
    %c0_7 = arith.constant 0 : index
    %c0_8 = arith.constant 0 : index
    %c0_9 = arith.constant 0 : index
    %9 = vector.load %arg5[%c0_6, %c0_7, %c0_8, %c0_9] : memref<1x1x32x128xf32, #tpu.memory_space<vmem>>, vector<1x1x32x128xf32>
    %10 = vector.shape_cast %9 : vector<1x1x32x128xf32> to vector<32x128xf32>
    %11 = vector.shape_cast %8 : vector<32x128xf32> to vector<1x1x32x128xf32>
    tpu.vector_store %arg5[%c0_6, %c0_7, %c0_8, %c0_9], %11 {strides = array<i32>} : memref<1x1x32x128xf32, #tpu.memory_space<vmem>>, vector<1x1x32x128xf32>,
    return
  }
  func.func @transform_0(%arg0: i32, %arg1: i32, %arg2: i32) -> (i32, i32, i32, i32) {
    %c1_i32 = arith.constant 1 : i32
    %0 = arith.muli %arg1, %c1_i32 : i32
    %1 = arith.addi %0, %arg2 : i32
    %c0_i32 = arith.constant 0 : i32
    %c0_i32_0 = arith.constant 0 : i32
    %c0_i32_1 = arith.constant 0 : i32
    return %arg0, %c0_i32, %1, %c0_i32_0 : i32, i32, i32, i32
  }
  func.func @transform_1(%arg0: i32, %arg1: i32, %arg2: i32) -> (i32, i32, i32) {
    %c1_i32 = arith.constant 1 : i32
    %0 = arith.muli %arg1, %c1_i32 : i32
    %1 = arith.addi %0, %arg2 : i32
    %c0_i32 = arith.constant 0 : i32
    %c0_i32_0 = arith.constant 0 : i32
    return %arg0, %1, %c0_i32 : i32, i32, i32
  }
  func.func @transform_2(%arg0: i32, %arg1: i32, %arg2: i32) -> (i32, i32, i32, i32) {
    %c0_i32 = arith.constant 0 : i32
    %c0_i32_0 = arith.constant 0 : i32
    %c0_i32_1 = arith.constant 0 : i32
    return %arg0, %arg1, %c0_i32, %c0_i32_0 : i32, i32, i32, i32
  }
}

</mosaic_0001>

<llo_original>
// kernel: tpu_custom_call.1
$region0: #{tpu_custom_call.1}
  #allocation0 [shape = 'u32[]', space=smem, size = 0x4, offset = 0x4, fixed_abs, tag = 'smem constant byte address 0x4 - core index']
  #allocation1 [shape = 'u32[72,128]{1,0:T(1,128)}', space=vmem, size = 0x9000, scoped, tag = 'internal scratch']
  %s0 = inlined_call_operand.hbm [shape: f32[2,2,32,128], index: 0, kind: input, shape index: {}]
  %s1 = inlined_call_operand.hbm [shape: f32[2,32,128], index: 1, kind: input, shape index: {}]
  %s2 = inlined_call_operand.hbm [shape: f32[1,1,32,128], index: 2, kind: output, shape index: {}]
  %s3 = sld [smem:[#allocation0]]
  $region37: #{tpu_custom_call.1} parent=0
    _
  %s5 = ssub.s32 1, %s3
  %s6 = scalar_select 0, %s5, %s3
  $region1: #{tpu_custom_call.1} parent=0
    #allocation2 [shape = 'u8[65536]{0}', space=vmem, size = 0x10000, scoped, tag = 'input window, operand 0, single buffered']
    #allocation3 [shape = 's32[1]{0}', space=sflag, size = 0x4, scoped, tag = 'scoped memory for tpu_custom_call.1']
    #allocation4 [shape = 's32[1]{0}', space=sflag, size = 0x4, scoped, tag = 'scoped memory for tpu_custom_call.1']
    #allocation5 [shape = 'u8[32768]{0}', space=vmem, size = 0x8000, scoped, tag = 'input window, operand 1, single buffered']
    #allocation6 [shape = 's32[1]{0}', space=sflag, size = 0x4, scoped, tag = 'scoped memory for tpu_custom_call.1']
    #allocation7 [shape = 'u8[16384]{0}', space=vmem, size = 0x4000, scoped, tag = 'output window, operand 0, single buffered']
    %7 = vsyncpa [#allocation3], 0
    %8 = vsyncpa [#allocation6], 0
    %9 = vsyncpa [#allocation4], 0
    // Predicated region
    $region2: #{tpu_custom_call.1} parent=1 // pred_check
      _
    $region3: #{tpu_custom_call.1} parent=1 // pred_check_branch
      %11 = sbr.rel (0) target = $region5
    $region4: #{tpu_custom_call.1} parent=1 // pred_region
      %s12 = sadd.s32 0, 0
      %s13 = smul.u32 4, %s12
      %15 = vsyncadd [#allocation3], 0
      %s16 = smul.addr %s13, 8
      %s17 = scalar_lea.hbm %s0, %s16
      %s18 = sshll.u32 %s17, 4
      %s19 = int_to_ptr.hbm [resolvable:$true] %s18
      %s20 = sshll.u32 [#allocation2], 4
      %s21 = int_to_ptr.vmem [resolvable:$true] %s20
      %26 = dma.hbm_to_vmem [thread:$0]  %s19, 2048, %s21, [#allocation3], 128, 128, 8
    $region5: #{tpu_custom_call.1} parent=1 // pred_fallthru
      _
    // Predicated region
    $region6: #{tpu_custom_call.1} parent=1 // pred_check
      _
    $region7: #{tpu_custom_call.1} parent=1 // pred_check_branch
      %28 = sbr.rel (0) target = $region9
    $region8: #{tpu_custom_call.1} parent=1 // pred_region
      %s29 = sadd.s32 0, 0
      %s30 = smul.u32 4, %s29
      %32 = vsyncadd [#allocation6], 0
      %s33 = smul.addr %s30, 8
      %s34 = scalar_lea.hbm %s1, %s33
      %s35 = sshll.u32 %s34, 4
      %s36 = int_to_ptr.hbm [resolvable:$true] %s35
      %s37 = sshll.u32 [#allocation5], 4
      %s38 = int_to_ptr.vmem [resolvable:$true] %s37
      %43 = dma.hbm_to_vmem [thread:$0]  %s36, 1024, %s38, [#allocation6], 128, 128, 8
    $region9: #{tpu_custom_call.1} parent=1 // pred_fallthru
      _
    // Predicated region
    $region10: #{tpu_custom_call.1} parent=1 // pred_check
      _
    $region11: #{tpu_custom_call.1} parent=1 // pred_check_branch
      %45 = sbr.rel (0) target = $region13
    $region12: #{tpu_custom_call.1} parent=1 // pred_region
      %47 = dma.done [#allocation3], 2048
    $region13: #{tpu_custom_call.1} parent=1 // pred_fallthru
      _
    // Predicated region
    $region14: #{tpu_custom_call.1} parent=1 // pred_check
      _
    $region15: #{tpu_custom_call.1} parent=1 // pred_check_branch
      %49 = sbr.rel (0) target = $region17
    $region16: #{tpu_custom_call.1} parent=1 // pred_region
      %51 = dma.done [#allocation6], 1024
    $region17: #{tpu_custom_call.1} parent=1 // pred_fallthru
      _
    %s52 = sadd.s32 0, 0
    %s53 = smul.u32 4, %s52
    %s54 = sadd.s32 0, 0
    %s55 = smul.u32 4, %s54
    %p56 = scmp.eq.s32.totalorder 0, 0
    // Predicated region
    $region18: #{tpu_custom_call.1} parent=1 // pred_check
      %p57 = pneg %p56
    $region19: #{tpu_custom_call.1} parent=1 // pred_check_branch
      %59 = sbr.rel (%p57) target = $region21
    $region20: #{tpu_custom_call.1} parent=1 // pred_region
      %60 = vst [vmem:[#allocation7] sm:$0xff] 0.0
      %61 = vst [vmem:[#allocation7 + $0x8] sm:$0xff] 0.0
      %62 = vst [vmem:[#allocation7 + $0x10] sm:$0xff] 0.0
      %63 = vst [vmem:[#allocation7 + $0x18] sm:$0xff] 0.0
    $region21: #{tpu_custom_call.1} parent=1 // pred_fallthru
      _
    loop: start=0, step=1, limit=2
    $region22: #{tpu_custom_call.1} parent=1 // loop_pre_header
      _
    $region23: #{tpu_custom_call.1} parent=1 // loop_header
      %s65 = sphi 0, %s69
      %p66 = scmp.ge.s32.totalorder %s65, 2
      %v70 = vphi 0.0, %v132
      %v71 = vphi 0.0, %v133
      %v72 = vphi 0.0, %v134
      %v73 = vphi 0.0, %v135
    $region24: #{tpu_custom_call.1} parent=1 // loop_header_branch
      %68 = sbr.rel (%p66) target = $region28
    $region25: #{tpu_custom_call.1} parent=1 // loop_body
      %s74 = smul.u32 %s65, 64
      %s75 = scalar_lea.vmem [#allocation2], %s74
      %v76 = vld [vmem:[%s75] sm:$0xff]
      %v77 = vld [vmem:[%s75 + $0x8] sm:$0xff]
      %v78 = vld [vmem:[%s75 + $0x10] sm:$0xff]
      %v79 = vld [vmem:[%s75 + $0x18] sm:$0xff]
      %s80 = sadd.s32 32, %s74
      %s81 = scalar_lea.vmem [#allocation2], %s80
      %v82 = vld [vmem:[%s81] sm:$0xff]
      %v83 = vld [vmem:[%s81 + $0x8] sm:$0xff]
      %v84 = vld [vmem:[%s81 + $0x10] sm:$0xff]
      %v85 = vld [vmem:[%s81 + $0x18] sm:$0xff]
      %s86 = smul.u32 %s65, 32
      %s87 = scalar_lea.vmem [#allocation5], %s86
      %v88 = vld [vmem:[%s87] sm:$0xff]
      %v89 = vld [vmem:[%s87 + $0x8] sm:$0xff]
      %v90 = vld [vmem:[%s87 + $0x10] sm:$0xff]
      %v91 = vld [vmem:[%s87 + $0x18] sm:$0xff]
      %v92 = vsub.f32 %v76, %v88
      %v93 = vsub.f32 %v77, %v89
      %v94 = vsub.f32 %v78, %v90
      %v95 = vsub.f32 %v79, %v91
      %v96 = vand.u32 2147483647, %v92
      %v97 = vand.u32 2147483647, %v93
      %v98 = vand.u32 2147483647, %v94
      %v99 = vand.u32 2147483647, %v95
      %v100 = vsub.f32 %v82, %v88
      %v101 = vsub.f32 %v83, %v89
      %v102 = vsub.f32 %v84, %v90
      %v103 = vsub.f32 %v85, %v91
      %v104 = vand.u32 2147483647, %v100
      %v105 = vand.u32 2147483647, %v101
      %v106 = vand.u32 2147483647, %v102
      %v107 = vand.u32 2147483647, %v103
      %v108 = vadd.f32 %v96, %v104
      %v109 = vadd.f32 %v97, %v105
      %v110 = vadd.f32 %v98, %v106
      %v111 = vadd.f32 %v99, %v107
      %v112 = vmul.f32 %v108, 0.5
      %v113 = vmul.f32 %v109, 0.5
      %v114 = vmul.f32 %v110, 0.5
      %v115 = vmul.f32 %v111, 0.5
      %v116 = vsub.f32 %v76, %v82
      %v117 = vsub.f32 %v77, %v83
      %v118 = vsub.f32 %v78, %v84
      %v119 = vsub.f32 %v79, %v85
      %v120 = vand.u32 2147483647, %v116
      %v121 = vand.u32 2147483647, %v117
      %v122 = vand.u32 2147483647, %v118
      %v123 = vand.u32 2147483647, %v119
      %v124 = vmul.f32 %v120, 0.4875
      %v125 = vmul.f32 %v121, 0.4875
      %v126 = vmul.f32 %v122, 0.4875
      %v127 = vmul.f32 %v123, 0.4875
      %v128 = vsub.f32 %v112, %v124
      %v129 = vsub.f32 %v113, %v125
      %v130 = vsub.f32 %v114, %v126
      %v131 = vsub.f32 %v115, %v127
      %v132 = vadd.f32 %v70, %v128
      %v133 = vadd.f32 %v71, %v129
      %v134 = vadd.f32 %v72, %v130
      %v135 = vadd.f32 %v73, %v131
    $region26: #{tpu_custom_call.1} parent=1 // loop_footer
      %s69 = sadd.s32 1, %s65
    $region27: #{tpu_custom_call.1} parent=1 // loop_footer_branch
      %64 = sbr.rel target = $region23
    $region28: #{tpu_custom_call.1} parent=1 // loop_exit
      _
    %v136 = vld [vmem:[#allocation7] sm:$0xff]
    %v137 = vld [vmem:[#allocation7 + $0x8] sm:$0xff]
    %v138 = vld [vmem:[#allocation7 + $0x10] sm:$0xff]
    %v139 = vld [vmem:[#allocation7 + $0x18] sm:$0xff]
    %v140 = vadd.f32 %v136, %v70
    %v141 = vadd.f32 %v137, %v71
    %v142 = vadd.f32 %v138, %v72
    %v143 = vadd.f32 %v139, %v73
    %144 = vst [vmem:[#allocation7] sm:$0xff] %v140
    %145 = vst [vmem:[#allocation7 + $0x8] sm:$0xff] %v141
    %146 = vst [vmem:[#allocation7 + $0x10] sm:$0xff] %v142
    %147 = vst [vmem:[#allocation7 + $0x18] sm:$0xff] %v143
    // Predicated region
    $region29: #{tpu_custom_call.1} parent=1 // pred_check
      _
    $region30: #{tpu_custom_call.1} parent=1 // pred_check_branch
      %149 = sbr.rel (0) target = $region32
    $region31: #{tpu_custom_call.1} parent=1 // pred_region
      %151 = vsyncadd [#allocation4], 0
      %s152 = sshll.u32 [#allocation7], 4
      %s153 = int_to_ptr.vmem [resolvable:$true] %s152
      %s154 = sshll.u32 %s2, 4
      %s155 = int_to_ptr.hbm [resolvable:$true] %s154
      %160 = dma.vmem_to_hbm [thread:$0]  %s153, 512, %s155, [#allocation4], 128, 128, 8
    $region32: #{tpu_custom_call.1} parent=1 // pred_fallthru
      _
    // Predicated region
    $region33: #{tpu_custom_call.1} parent=1 // pred_check
      _
    $region34: #{tpu_custom_call.1} parent=1 // pred_check_branch
      %162 = sbr.rel (0) target = $region36
    $region35: #{tpu_custom_call.1} parent=1 // pred_region
      %164 = dma.done [#allocation4], 512
    $region36: #{tpu_custom_call.1} parent=1 // pred_fallthru
      _
    %165 = vsyncpa [#allocation3], 1
    %166 = vsyncpa [#allocation6], 1
    %167 = vsyncpa [#allocation4], 1

</llo_original>
